<compile_context>
chip_gen: v7x
topology: tpu7x:2x2x1
jax: 0.10.0
libtpu: 0.0.40
codegen_flags: <defaults>
</compile_context>

<pallas_src>
import math
import numpy as np

import jax
import jax.numpy as jnp
from jax.experimental import pallas as pl
from jax.experimental.pallas import tpu as pltpu


# ----------------------------------------------------------------------------
# Tiling helpers (lane dimension = flattened rows, always a multiple of 128)
# ----------------------------------------------------------------------------
def _lane_tiling(R, cap=2048):
    """Lane block size (multiple of 128) and padded lane extent."""
    r128 = ((R + 127) // 128) * 128
    rb = min(cap, r128)
    r_pad = ((R + rb - 1) // rb) * rb
    return rb, r_pad


def _pad_lanes(x, r_pad):
    R = x.shape[-1]
    if R == r_pad:
        return x
    return jnp.pad(x, ((0, 0), (0, r_pad - R)))


# ----------------------------------------------------------------------------
# Pallas kernels
# ----------------------------------------------------------------------------
def _make_decode_kernel(fsize, n_anchors, anchors_wh, rb):
    """Box-decode kernel: (4, rb) raw logits -> (4, rb) decoded boxes.

    Geometry (grid_x, grid_y, anchor_w, anchor_h) is generated in-kernel from
    the global lane index; anchors are baked in as compile-time constants.
    """
    f = float(fsize)
    a_f = float(n_anchors)
    anchors = [(float(w), float(h)) for w, h in anchors_wh]

    def kernel(x_ref, pred_ref):
        i = pl.program_id(0)
        x = x_ref[...]                                                 # (4, rb)
        ch = jax.lax.broadcasted_iota(jnp.int32, x.shape, 0)
        lane = jax.lax.broadcasted_iota(jnp.int32, x.shape, 1).astype(jnp.float32)
        r = lane + (i * rb).astype(jnp.float32)                        # global row
        # r = ((b * A + a) * f + gy) * f + gx   (exact f32 integer math)
        q1 = jnp.floor(r / f)
        gx = r - q1 * f
        q2 = jnp.floor(q1 / f)
        gy = q1 - q2 * f
        aidx = q2 - jnp.floor(q2 / a_f) * a_f
        aw = jnp.full_like(r, anchors[-1][0])
        ah = jnp.full_like(r, anchors[-1][1])
        for k in range(n_anchors - 2, -1, -1):
            sel = aidx < (k + 0.5)
            aw = jnp.where(sel, anchors[k][0], aw)
            ah = jnp.where(sel, anchors[k][1], ah)
        g = jnp.where(ch == 0, gx,
            jnp.where(ch == 1, gy,
            jnp.where(ch == 2, aw, ah)))
        # pred = [sig(x)+grid_x, sig(y)+grid_y, exp(w)*anchor_w, exp(h)*anchor_h]
        pred_ref[...] = jnp.where(ch < 2, jax.nn.sigmoid(x) + g, jnp.exp(x) * g)

    return kernel


def decode_pallas(x4_pad, rb, fsize, n_anchors, anchors_wh):
    C, r_pad = x4_pad.shape
    grid = (r_pad // rb,)
    kernel = _make_decode_kernel(fsize, n_anchors, anchors_wh, rb)
    return pl.pallas_call(
        kernel,
        grid=grid,
        in_specs=[pl.BlockSpec((C, rb), lambda i: (0, i))],
        out_specs=pl.BlockSpec((C, rb), lambda i: (0, i)),
        out_shape=jax.ShapeDtypeStruct((C, r_pad), jnp.float32),
        compiler_params=pltpu.CompilerParams(dimension_semantics=("parallel",)),
    )(x4_pad)


def _loss_kernel(x_ref, t_ref, mk_ref, out_ref):
    # x_ref : (n_ch, rb) RAW conv logits (sigmoid decode fused here)
    # t_ref : (n_ch, rb) dense target (channel-major)
    # mk_ref: (3, rb) compact masks: rows = [tgt_mask indicator, obj_mask, tgt_scale]
    # out_ref: (8, 128) per-block partial sums; lanes 0..4 hold
    #          [loss_xy, loss_wh, loss_obj, loss_cls, loss_l2].
    x = x_ref[...]
    t = t_ref[...]
    mk = mk_ref[...]
    tgt = mk[0:1, :]
    obj = mk[1:2, :]
    sc = mk[2:3, :]

    ch = jax.lax.broadcasted_iota(jnp.int32, x.shape, 0)
    # fused decode: sigmoid on channels {0,1} and {4..}; channels 2,3 stay raw
    s = jnp.where((ch < 2) | (ch >= 4), jax.nn.sigmoid(x), x)
    # per-channel multiplicative mask, reconstructing the in-place masking of
    # the PyTorch forward:
    #   ch 0,1  : tgt_mask
    #   ch 2,3  : tgt_mask * tgt_scale
    #   ch 4    : obj_mask
    #   ch >= 5 : tgt_mask
    m = jnp.where(ch < 2, tgt,
        jnp.where(ch < 4, tgt * sc,
        jnp.where(ch == 4, obj, tgt)))
    o = s * m
    tm = t * m

    # torch F.binary_cross_entropy semantics: log terms clamped at -100.
    ob = jnp.clip(o, 0.0, 1.0)
    log_p = jnp.maximum(jnp.log(ob), -100.0)
    log_q = jnp.maximum(jnp.log(1.0 - ob), -100.0)
    bce = -(tm * log_p + (1.0 - tm) * log_q)
    sq = (o - tm) * (o - tm)

    w_xy = jnp.where(ch < 2, sc * sc, 0.0)                           # BCE weight
    l_xy = jnp.sum(bce * w_xy)                                       # BCE(xy), weight=scale^2
    l_wh = 0.5 * jnp.sum(jnp.where((ch >= 2) & (ch < 4), sq, 0.0))   # MSE(wh)/2
    l_obj = jnp.sum(jnp.where(ch == 4, o, 0.0))                      # sum(output[...,4])
    l_cls = jnp.sum(jnp.where(ch >= 5, bce, 0.0))                    # BCE(cls)
    l_l2 = jnp.sum(sq)                                               # MSE(all)

    lane = jax.lax.broadcasted_iota(jnp.int32, out_ref.shape, 1)
    out_ref[...] = (jnp.where(lane == 0, l_xy, 0.0)
                    + jnp.where(lane == 1, l_wh, 0.0)
                    + jnp.where(lane == 2, l_obj, 0.0)
                    + jnp.where(lane == 3, l_cls, 0.0)
                    + jnp.where(lane == 4, l_l2, 0.0))


def loss_pallas(x_pad, t_pad, mk_pad, rb):
    n_ch, r_pad = x_pad.shape
    nblk = r_pad // rb
    out = pl.pallas_call(
        _loss_kernel,
        grid=(nblk,),
        in_specs=[pl.BlockSpec((n_ch, rb), lambda i: (0, i)),
                  pl.BlockSpec((n_ch, rb), lambda i: (0, i)),
                  pl.BlockSpec((3, rb), lambda i: (0, i))],
        out_specs=pl.BlockSpec((8, 128), lambda i: (i, 0)),
        out_shape=jax.ShapeDtypeStruct((nblk * 8, 128), jnp.float32),
        compiler_params=pltpu.CompilerParams(dimension_semantics=("parallel",)),
    )(x_pad, t_pad, mk_pad)
    # tiny final reduction of per-block partials in JAX; lanes 0..4 are the losses
    return jnp.sum(out.reshape(nblk, 8, 128)[:, 0, :], axis=0)[:5]


# ----------------------------------------------------------------------------
# Host-side glue: bboxes_iou and build_target (faithful NumPy ports)
# ----------------------------------------------------------------------------
def bboxes_iou_np(a, b, xyxy=True, GIoU=False, DIoU=False, CIoU=False):
    a = np.asarray(a, np.float32)
    b = np.asarray(b, np.float32)
    if a.shape[1] != 4 or b.shape[1] != 4:
        raise IndexError
    if xyxy:
        tl = np.maximum(a[:, None, :2], b[:, :2])
        br = np.minimum(a[:, None, 2:], b[:, 2:])
        con_tl = np.minimum(a[:, None, :2], b[:, :2])
        con_br = np.maximum(a[:, None, 2:], b[:, 2:])
        rho2 = ((a[:, None, 0] + a[:, None, 2] - (b[:, 0] + b[:, 2])) ** 2 / 4
                + (a[:, None, 1] + a[:, None, 3] - (b[:, 1] + b[:, 3])) ** 2 / 4)
        w1 = a[:, 2] - a[:, 0]
        h1 = a[:, 3] - a[:, 1]
        w2 = b[:, 2] - b[:, 0]
        h2 = b[:, 3] - b[:, 1]
        area_a = np.prod(a[:, 2:] - a[:, :2], axis=1)
        area_b = np.prod(b[:, 2:] - b[:, :2], axis=1)
    else:
        tl = np.maximum(a[:, None, :2] - a[:, None, 2:] / 2, b[:, :2] - b[:, 2:] / 2)
        br = np.minimum(a[:, None, :2] + a[:, None, 2:] / 2, b[:, :2] + b[:, 2:] / 2)
        con_tl = np.minimum(a[:, None, :2] - a[:, None, 2:] / 2, b[:, :2] - b[:, 2:] / 2)
        con_br = np.maximum(a[:, None, :2] + a[:, None, 2:] / 2, b[:, :2] + b[:, 2:] / 2)
        rho2 = (((a[:, None, :2] - b[:, :2]) ** 2) / 4).sum(axis=-1)
        w1 = a[:, 2]
        h1 = a[:, 3]
        w2 = b[:, 2]
        h2 = b[:, 3]
        area_a = np.prod(a[:, 2:], axis=1)
        area_b = np.prod(b[:, 2:], axis=1)
    en = (tl < br).astype(np.float32).prod(axis=2)
    area_i = np.prod(br - tl, axis=2) * en
    area_u = area_a[:, None] + area_b - area_i
    iou = area_i / area_u
    if GIoU or DIoU or CIoU:
        if GIoU:
            area_c = np.prod(con_br - con_tl, axis=2)
            return iou - (area_c - area_u) / area_c
        c2 = ((con_br - con_tl) ** 2).sum(axis=2) + 1e-16
        if DIoU:
            return iou - rho2 / c2
        if CIoU:
            v = 4 / math.pi ** 2 * (np.arctan(w1 / h1)[:, None] - np.arctan(w2 / h2)) ** 2
            alpha = v / (1 - iou + v)
            return iou - (rho2 / c2 + v * alpha)
    return iou


class YoloLossPallas:
    def __init__(self, n_classes=80, n_anchors=3, batch=2, image_size=608):
        self.strides = [8, 16, 32]
        self.n_classes = n_classes
        self.n_anchors = n_anchors
        self.anchors = [[12, 16], [19, 36], [40, 28], [36, 75], [76, 55],
                        [72, 146], [142, 110], [192, 243], [459, 401]]
        self.anch_masks = [[0, 1, 2], [3, 4, 5], [6, 7, 8]]
        self.ignore_thre = 0.5
        self.batch = batch
        self.image_size = image_size

        self.masked_anchors, self.ref_anchors, self.fsizes = [], [], []
        for i in range(3):
            all_anchors_grid = [(w / self.strides[i], h / self.strides[i])
                                for w, h in self.anchors]
            masked_anchors = np.array([all_anchors_grid[j] for j in self.anch_masks[i]],
                                      dtype=np.float32)
            ref_anchors = np.zeros((len(all_anchors_grid), 4), dtype=np.float32)
            ref_anchors[:, 2:] = np.array(all_anchors_grid, dtype=np.float32)
            self.masked_anchors.append(masked_anchors)
            self.ref_anchors.append(ref_anchors)
            self.fsizes.append(image_size // self.strides[i])

    def build_target(self, pred, labels, batchsize, fsize, n_ch, output_id):
        # Compact outputs: tgt_mask is identical across channels -> indicator,
        # tgt_scale is identical across its 2 channels -> scalar per cell.
        A = self.n_anchors
        tgt_ind = np.zeros((batchsize, A, fsize, fsize), np.float32)
        obj_mask = np.ones((batchsize, A, fsize, fsize), np.float32)
        tgt_scale = np.zeros((batchsize, A, fsize, fsize), np.float32)
        target = np.zeros((batchsize, A, fsize, fsize, n_ch), np.float32)

        nlabel = (labels.sum(axis=2) > 0).sum(axis=1)
        truth_x_all = (labels[:, :, 2] + labels[:, :, 0]) / (self.strides[output_id] * 2)
        truth_y_all = (labels[:, :, 3] + labels[:, :, 1]) / (self.strides[output_id] * 2)
        truth_w_all = (labels[:, :, 2] - labels[:, :, 0]) / self.strides[output_id]
        truth_h_all = (labels[:, :, 3] - labels[:, :, 1]) / self.strides[output_id]
        truth_i_all = truth_x_all.astype(np.int16)
        truth_j_all = truth_y_all.astype(np.int16)

        for b in range(batchsize):
            n = int(nlabel[b])
            if n == 0:
                continue
            truth_box = np.zeros((n, 4), np.float32)
            truth_box[:n, 2] = truth_w_all[b, :n]
            truth_box[:n, 3] = truth_h_all[b, :n]
            truth_i = truth_i_all[b, :n]
            truth_j = truth_j_all[b, :n]

            anchor_ious_all = bboxes_iou_np(truth_box, self.ref_anchors[output_id],
                                            xyxy=True, CIoU=True)
            best_n_all = anchor_ious_all.argmax(axis=1)
            best_n = best_n_all % 3
            best_n_mask = ((best_n_all == self.anch_masks[output_id][0])
                           | (best_n_all == self.anch_masks[output_id][1])
                           | (best_n_all == self.anch_masks[output_id][2]))
            if best_n_mask.sum() == 0:
                continue

            truth_box[:n, 0] = truth_x_all[b, :n]
            truth_box[:n, 1] = truth_y_all[b, :n]

            pred_ious = bboxes_iou_np(pred[b].reshape(-1, 4), truth_box, xyxy=False)
            pred_best_iou = pred_ious.max(axis=1)
            pred_best_iou = pred_best_iou > self.ignore_thre
            pred_best_iou = pred_best_iou.reshape(pred[b].shape[:3])
            obj_mask[b] = ~pred_best_iou

            for ti in range(best_n.shape[0]):
                if best_n_mask[ti] == 1:
                    i, j = int(truth_i[ti]), int(truth_j[ti])
                    a = int(best_n[ti])
                    obj_mask[b, a, j, i] = 1
                    tgt_ind[b, a, j, i] = 1
                    target[b, a, j, i, 0] = (truth_x_all[b, ti]
                                             - truth_x_all[b, ti].astype(np.int16).astype(np.float32))
                    target[b, a, j, i, 1] = (truth_y_all[b, ti]
                                             - truth_y_all[b, ti].astype(np.int16).astype(np.float32))
                    target[b, a, j, i, 2] = np.log(
                        truth_w_all[b, ti] / self.masked_anchors[output_id][a, 0] + 1e-16)
                    target[b, a, j, i, 3] = np.log(
                        truth_h_all[b, ti] / self.masked_anchors[output_id][a, 1] + 1e-16)
                    target[b, a, j, i, 4] = 1
                    target[b, a, j, i, 5 + int(labels[b, ti, 4])] = 1
                    tgt_scale[b, a, j, i] = np.sqrt(
                        2 - truth_w_all[b, ti] * truth_h_all[b, ti] / fsize / fsize)
        return obj_mask, tgt_ind, tgt_scale, target

    def __call__(self, xin, labels, return_aux=False):
        labels_np = np.asarray(labels, dtype=np.float32)
        n_ch = 5 + self.n_classes
        A = self.n_anchors

        # ---- Phase 1: dispatch all decode kernels (no host sync in the loop)
        x_cms, preds, dims = [], [], []
        for output_id, output in enumerate(xin):
            B, f = output.shape[0], output.shape[2]
            R = B * A * f * f
            rb, r_pad = _lane_tiling(R)
            # (B, A*n_ch, f, f) -> (n_ch, B*A*f*f) channel-major; rows iterate (b, a, gy, gx)
            x_cm = jnp.transpose(output.reshape(B, A, n_ch, f, f),
                                 (2, 0, 1, 3, 4)).reshape(n_ch, R)
            x_cm = _pad_lanes(x_cm, r_pad)
            pred_cm = decode_pallas(x_cm[0:4, :], rb, f, A,
                                    self.masked_anchors[output_id])
            x_cms.append(x_cm)
            preds.append(pred_cm)
            dims.append((B, f, R, rb, r_pad))

        # ---- Phase 2: single device->host pull, then host-side build_target
        preds_np = [np.asarray(p) for p in preds]
        tgts = []
        for output_id, (pred_cm, (B, f, R, rb, r_pad)) in enumerate(zip(preds_np, dims)):
            pred_np = np.ascontiguousarray(pred_cm[:, :R].T).reshape(B, A, f, f, 4)
            obj_mask, tgt_ind, tgt_scale, target = self.build_target(
                pred_np, labels_np, B, f, n_ch, output_id)
            mk = np.stack([tgt_ind.reshape(-1), obj_mask.reshape(-1),
                           tgt_scale.reshape(-1)], axis=0).astype(np.float32)
            t_cm = np.ascontiguousarray(target.reshape(-1, n_ch).T).astype(np.float32)
            tgts.append((t_cm, mk))

        # ---- Phase 3: dispatch all loss kernels
        totals = jnp.zeros((5,), jnp.float32)
        aux = []
        for x_cm, (t_cm, mk), pred_cm, (B, f, R, rb, r_pad) in zip(x_cms, tgts, preds_np, dims):
            t_pad = _pad_lanes(jnp.asarray(t_cm), r_pad)
            mk_pad = _pad_lanes(jnp.asarray(mk), r_pad)
            lvec = loss_pallas(x_cm, t_pad, mk_pad, rb)
            totals = totals + lvec
            if return_aux:
                aux.append((x_cm, t_pad, mk_pad, pred_cm, f, R))

        loss = totals[0] + totals[1] + totals[2] + totals[3]
        result = (loss, totals[0], totals[1], totals[2], totals[3], totals[4])
        if return_aux:
            return result, aux
        return result


# ----------------------------------------------------------------------------
# NumPy references (for verification of the Pallas kernels)
# ----------------------------------------------------------------------------
def _reference_decode_np(x4, f, A, anchors):
    # x4: (4, R) raw logits (channel-major); returns (4, R) decoded boxes.
    R = x4.shape[1]
    r = np.arange(R)
    gx = (r % f).astype(np.float32)
    gy = ((r // f) % f).astype(np.float32)
    a = (r // (f * f)) % A
    anchors = np.asarray(anchors, np.float32)
    aw = anchors[a, 0]
    ah = anchors[a, 1]
    x4d = x4.astype(np.float64)
    s = 1.0 / (1.0 + np.exp(-x4d))
    pred = np.stack([s[0] + gx, s[1] + gy,
                     np.exp(x4d[2]) * aw, np.exp(x4d[3]) * ah], axis=0)
    return pred.astype(np.float32)


def _reference_losses_np(x_cm, t_cm, mk):
    # x_cm, t_cm: (n_ch, R); mk: (3, R) rows = [tgt_ind, obj_mask, tgt_scale]
    n_ch = x_cm.shape[0]
    ch = np.arange(n_ch)[:, None]
    tgt, obj, sc = mk[0:1], mk[1:2], mk[2:3]
    s = np.where((ch < 2) | (ch >= 4), 1.0 / (1.0 + np.exp(-x_cm)), x_cm)
    m = np.where(ch < 2, tgt, np.where(ch < 4, tgt * sc, np.where(ch == 4, obj, tgt)))
    o = s * m
    t = t_cm * m
    ob = np.clip(o, 0.0, 1.0)
    with np.errstate(divide="ignore"):
        log_p = np.maximum(np.log(ob), -100.0)
        log_q = np.maximum(np.log(1.0 - ob), -100.0)
    bce = -(t * log_p + (1.0 - t) * log_q)
    sq = (o - t) ** 2
    l_xy = float(np.sum(bce[:2] * (sc * sc)))
    l_wh = 0.5 * float(np.sum(sq[2:4]))
    l_obj = float(np.sum(o[4]))
    l_cls = float(np.sum(bce[5:]))
    l_l2 = float(np.sum(sq))
    return np.array([l_xy, l_wh, l_obj, l_cls, l_l2], np.float64)


# ----------------------------------------------------------------------------
# Main
# ----------------------------------------------------------------------------
if __name__ == "__main__":
    B, A = 2, 3
    n_classes = 3                 # small class count -> n_ch = 8
    image_size = 128              # small image -> fsizes 16 / 8 / 4
    n_ch = 5 + n_classes

    loss_mod = YoloLossPallas(n_classes=n_classes, n_anchors=A,
                              batch=B, image_size=image_size)

    key = jax.random.PRNGKey(0)
    keys = jax.random.split(key, 3)
    xin = []
    for s, stride in enumerate(loss_mod.strides):
        f = image_size // stride
        xin.append(0.5 * jax.random.normal(keys[s], (B, A * n_ch, f, f), dtype=jnp.float32))

    # labels: (B, T, 5) = [x1, y1, x2, y2, class], zero-padded, pixel coords.
    labels_np = np.zeros((B, 4, 5), np.float32)
    labels_np[0, 0] = [10.0, 20.0, 60.0, 80.0, 1.0]
    labels_np[0, 1] = [70.0, 30.0, 120.0, 110.0, 2.0]
    labels_np[1, 0] = [5.0, 5.0, 40.0, 50.0, 0.0]
    labels_np[1, 1] = [30.0, 60.0, 100.0, 120.0, 2.0]
    labels_np[1, 2] = [80.0, 10.0, 120.0, 90.0, 1.0]
    labels = jnp.asarray(labels_np)

    (loss, lxy, lwh, lobj, lcls, ll2), aux = loss_mod(xin, labels, return_aux=True)
    jax.block_until_ready((loss, lxy, lwh, lobj, lcls, ll2))

    # --- verify Pallas kernels against NumPy references ---
    ref_tot = np.zeros(5, np.float64)
    for (x_cm, t_pad, mk_pad, pred_cm, f, R), anchors in zip(aux, loss_mod.masked_anchors):
        x_np = np.asarray(x_cm)
        pred_ref = _reference_decode_np(x_np[0:4, :R], f, A, anchors)
        np.testing.assert_allclose(np.asarray(pred_cm)[:, :R], pred_ref,
                                   rtol=1e-4, atol=1e-3)
        ref_tot += _reference_losses_np(x_np, np.asarray(t_pad), np.asarray(mk_pad))

    got = np.array([float(lxy), float(lwh), float(lobj), float(lcls), float(ll2)])
    np.testing.assert_allclose(got, ref_tot, rtol=2e-3, atol=2e-2)
    ref_loss = ref_tot[0] + ref_tot[1] + ref_tot[2] + ref_tot[3]
    np.testing.assert_allclose(float(loss), ref_loss, rtol=2e-3, atol=2e-2)
    assert np.all(np.isfinite(got)) and np.isfinite(float(loss))

    print("KERNEL_OK")
</pallas_src>

<mosaic_0001>
module attributes {stable_mosaic.version = 11 : i64} {
  func.func @kernel(%arg0: i32, %arg1: memref<4x1536xf32, #tpu.memory_space<vmem>>, %arg2: memref<4x1536xf32, #tpu.memory_space<vmem>>) attributes {dimension_semantics = [#tpu.dimension_semantics<parallel>], iteration_bounds = array<i64: 1>, scalar_prefetch = 0 : i64, scratch_operands = 0 : i64, tpu.core_type = #tpu.core_type<tc>, window_params = [{transform_indices = @transform_0, window_bounds = array<i64: 4, 1536>}, {transform_indices = @transform_1, window_bounds = array<i64: 4, 1536>}]} {
    %c0 = arith.constant 0 : index
    %c0_0 = arith.constant 0 : index
    %0 = vector.load %arg1[%c0, %c0_0] : memref<4x1536xf32, #tpu.memory_space<vmem>>, vector<4x1536xf32>
    %1 = tpu.iota {dimensions = array<i32: 0>} : vector<4x1536xi32>
    %2 = tpu.iota {dimensions = array<i32: 1>} : vector<4x1536xi32>
    %3 = arith.sitofp %2 : vector<4x1536xi32> to vector<4x1536xf32>
    %c1536_i32 = arith.constant 1536 : i32
    %4 = arith.muli %arg0, %c1536_i32 : i32
    %5 = arith.sitofp %4 : i32 to f32
    %6 = vector.broadcast %5 : f32 to vector<4x1536xf32>
    %7 = arith.addf %3, %6 : vector<4x1536xf32>
    %cst = arith.constant 1.600000e+01 : f32
    %8 = vector.broadcast %cst : f32 to vector<4x1536xf32>
    %9 = arith.divf %7, %8 : vector<4x1536xf32>
    %10 = math.floor %9 : vector<4x1536xf32>
    %cst_1 = arith.constant 1.600000e+01 : f32
    %11 = vector.broadcast %cst_1 : f32 to vector<4x1536xf32>
    %12 = arith.mulf %10, %11 : vector<4x1536xf32>
    %13 = arith.subf %7, %12 : vector<4x1536xf32>
    %cst_2 = arith.constant 1.600000e+01 : f32
    %14 = vector.broadcast %cst_2 : f32 to vector<4x1536xf32>
    %15 = arith.divf %10, %14 : vector<4x1536xf32>
    %16 = math.floor %15 : vector<4x1536xf32>
    %cst_3 = arith.constant 1.600000e+01 : f32
    %17 = vector.broadcast %cst_3 : f32 to vector<4x1536xf32>
    %18 = arith.mulf %16, %17 : vector<4x1536xf32>
    %19 = arith.subf %10, %18 : vector<4x1536xf32>
    %cst_4 = arith.constant 3.000000e+00 : f32
    %20 = vector.broadcast %cst_4 : f32 to vector<4x1536xf32>
    %21 = arith.divf %16, %20 : vector<4x1536xf32>
    %22 = math.floor %21 : vector<4x1536xf32>
    %cst_5 = arith.constant 3.000000e+00 : f32
    %23 = vector.broadcast %cst_5 : f32 to vector<4x1536xf32>
    %24 = arith.mulf %22, %23 : vector<4x1536xf32>
    %25 = arith.subf %16, %24 : vector<4x1536xf32>
    %cst_6 = arith.constant 5.000000e+00 : f32
    %26 = vector.broadcast %cst_6 : f32 to vector<4x1536xf32>
    %cst_7 = arith.constant 3.500000e+00 : f32
    %27 = vector.broadcast %cst_7 : f32 to vector<4x1536xf32>
    %cst_8 = arith.constant 1.500000e+00 : f32
    %28 = vector.broadcast %cst_8 : f32 to vector<4x1536xf32>
    %29 = arith.cmpf olt, %25, %28 : vector<4x1536xf32>
    %cst_9 = arith.constant 2.375000e+00 : f32
    %30 = vector.broadcast %cst_9 : f32 to vector<4x1536xf32>
    %31 = arith.select %29, %30, %26 : vector<4x1536xi1>, vector<4x1536xf32>
    %cst_10 = arith.constant 4.500000e+00 : f32
    %32 = vector.broadcast %cst_10 : f32 to vector<4x1536xf32>
    %33 = arith.select %29, %32, %27 : vector<4x1536xi1>, vector<4x1536xf32>
    %cst_11 = arith.constant 5.000000e-01 : f32
    %34 = vector.broadcast %cst_11 : f32 to vector<4x1536xf32>
    %35 = arith.cmpf olt, %25, %34 : vector<4x1536xf32>
    %cst_12 = arith.constant 1.500000e+00 : f32
    %36 = vector.broadcast %cst_12 : f32 to vector<4x1536xf32>
    %37 = arith.select %35, %36, %31 : vector<4x1536xi1>, vector<4x1536xf32>
    %cst_13 = arith.constant 2.000000e+00 : f32
    %38 = vector.broadcast %cst_13 : f32 to vector<4x1536xf32>
    %39 = arith.select %35, %38, %33 : vector<4x1536xi1>, vector<4x1536xf32>
    %c0_i32 = arith.constant 0 : i32
    %40 = vector.broadcast %c0_i32 : i32 to vector<4x1536xi32>
    %41 = arith.cmpi eq, %1, %40 : vector<4x1536xi32>
    %c1_i32 = arith.constant 1 : i32
    %42 = vector.broadcast %c1_i32 : i32 to vector<4x1536xi32>
    %43 = arith.cmpi eq, %1, %42 : vector<4x1536xi32>
    %c2_i32 = arith.constant 2 : i32
    %44 = vector.broadcast %c2_i32 : i32 to vector<4x1536xi32>
    %45 = arith.cmpi eq, %1, %44 : vector<4x1536xi32>
    %46 = arith.select %45, %37, %39 : vector<4x1536xi1>, vector<4x1536xf32>
    %47 = arith.select %43, %19, %46 : vector<4x1536xi1>, vector<4x1536xf32>
    %48 = arith.select %41, %13, %47 : vector<4x1536xi1>, vector<4x1536xf32>
    %c2_i32_14 = arith.constant 2 : i32
    %49 = vector.broadcast %c2_i32_14 : i32 to vector<4x1536xi32>
    %50 = arith.cmpi slt, %1, %49 : vector<4x1536xi32>
    %51 = arith.negf %0 : vector<4x1536xf32>
    %52 = math.exp %51 : vector<4x1536xf32>
    %cst_15 = arith.constant 1.000000e+00 : f32
    %53 = vector.broadcast %cst_15 : f32 to vector<4x1536xf32>
    %54 = arith.addf %53, %52 : vector<4x1536xf32>
    %55 = arith.divf %53, %54 : vector<4x1536xf32>
    %56 = arith.addf %55, %48 : vector<4x1536xf32>
    %57 = math.exp %0 : vector<4x1536xf32>
    %58 = arith.mulf %57, %48 : vector<4x1536xf32>
    %59 = arith.select %50, %56, %58 : vector<4x1536xi1>, vector<4x1536xf32>
    %c0_16 = arith.constant 0 : index
    %c0_17 = arith.constant 0 : index
    %60 = vector.load %arg2[%c0_16, %c0_17] : memref<4x1536xf32, #tpu.memory_space<vmem>>, vector<4x1536xf32>
    tpu.vector_store %arg2[%c0_16, %c0_17], %59 {strides = array<i32>} : memref<4x1536xf32, #tpu.memory_space<vmem>>, vector<4x1536xf32>,
    return
  }
  func.func @transform_0(%arg0: i32) -> (i32, i32) {
    %c0_i32 = arith.constant 0 : i32
    %c0_i32_0 = arith.constant 0 : i32
    return %c0_i32, %arg0 : i32, i32
  }
  func.func @transform_1(%arg0: i32) -> (i32, i32) {
    %c0_i32 = arith.constant 0 : i32
    %c0_i32_0 = arith.constant 0 : i32
    return %c0_i32, %arg0 : i32, i32
  }
}

</mosaic_0001>

<llo_original>
// kernel: tpu_custom_call.1
$region0: #{tpu_custom_call.1}
  #allocation0 [shape = 'u32[]', space=smem, size = 0x4, offset = 0x4, fixed_abs, tag = 'smem constant byte address 0x4 - core index']
  #allocation1 [shape = 'u32[144,128]{1,0:T(1,128)}', space=vmem, size = 0x12000, scoped, tag = 'internal scratch']
  %s0 = inlined_call_operand.hbm [shape: f32[4,1536], index: 0, kind: input, shape index: {}]
  %s1 = inlined_call_operand.hbm [shape: f32[4,1536], index: 1, kind: output, shape index: {}]
  %s2 = sld [smem:[#allocation0]]
  $region18: #{tpu_custom_call.1} parent=0
    _
  %s4 = ssub.s32 1, %s2
  %s5 = scalar_select 0, %s4, %s2
  $region1: #{tpu_custom_call.1} parent=0
    #allocation2 [shape = 'u8[24576]{0}', space=vmem, size = 0x6000, scoped, tag = 'input window, operand 0, single buffered']
    #allocation3 [shape = 's32[1]{0}', space=sflag, size = 0x4, scoped, tag = 'scoped memory for tpu_custom_call.1']
    #allocation4 [shape = 's32[1]{0}', space=sflag, size = 0x4, scoped, tag = 'scoped memory for tpu_custom_call.1']
    #allocation5 [shape = 'u8[24576]{0}', space=vmem, size = 0x6000, scoped, tag = 'output window, operand 0, single buffered']
    %6 = vsyncpa [#allocation3], 0
    %7 = vsyncpa [#allocation4], 0
    // Predicated region
    $region2: #{tpu_custom_call.1} parent=1 // pred_check
      _
    $region3: #{tpu_custom_call.1} parent=1 // pred_check_branch
      %9 = sbr.rel (0) target = $region5
    $region4: #{tpu_custom_call.1} parent=1 // pred_region
      %s11 = ssub.s32 768, 768
      %12 = vsyncadd [#allocation3], %s11
      %s14 = sshll.u32 [#allocation2], 4
      %s15 = int_to_ptr.vmem [resolvable:$true] %s14
      %17 = dma.hbm_to_vmem [thread:$0]  %s0, 768, %s15, [#allocation3]
    $region5: #{tpu_custom_call.1} parent=1 // pred_fallthru
      _
    // Predicated region
    $region6: #{tpu_custom_call.1} parent=1 // pred_check
      _
    $region7: #{tpu_custom_call.1} parent=1 // pred_check_branch
      %19 = sbr.rel (0) target = $region9
    $region8: #{tpu_custom_call.1} parent=1 // pred_region
      %20 = dma.done [#allocation3], 768
    $region9: #{tpu_custom_call.1} parent=1 // pred_fallthru
      _
    %v21 = vld [vmem:[#allocation2] sm:$0xff]
    %v22 = vld [vmem:[#allocation2 + $0x8] sm:$0xff]
    %v23 = vld [vmem:[#allocation2 + $0x10] sm:$0xff]
    %v24 = vld [vmem:[#allocation2 + $0x18] sm:$0xff]
    %v25 = vld [vmem:[#allocation2 + $0x20] sm:$0xff]
    %v26 = vld [vmem:[#allocation2 + $0x28] sm:$0xff]
    %v27 = vlaneseq
    %v28 = vshrl.u32 %v27, 7
    %v29 = vlaneseq
    %v30 = vand.u32 %v29, 127
    %v31 = vadd.s32 %v30, 128
    %v32 = vadd.s32 %v30, 256
    %v33 = vadd.s32 %v30, 384
    %v34 = vadd.s32 %v30, 512
    %v35 = vadd.s32 %v30, 640
    %v36 = vadd.s32 %v30, 768
    %v37 = vadd.s32 %v30, 896
    %v38 = vadd.s32 %v30, 1024
    %v39 = vadd.s32 %v30, 1152
    %v40 = vadd.s32 %v30, 1280
    %v41 = vadd.s32 %v30, 1408
    %v42 = vcvt.s32.f32 %v30
    %v43 = vcvt.s32.f32 %v31
    %v44 = vcvt.s32.f32 %v32
    %v45 = vcvt.s32.f32 %v33
    %v46 = vcvt.s32.f32 %v34
    %v47 = vcvt.s32.f32 %v35
    %v48 = vcvt.s32.f32 %v36
    %v49 = vcvt.s32.f32 %v37
    %v50 = vcvt.s32.f32 %v38
    %v51 = vcvt.s32.f32 %v39
    %v52 = vcvt.s32.f32 %v40
    %v53 = vcvt.s32.f32 %v41
    %s54 = smul.u32 0, 1536
    %s55 = scvt.s32.f32 %s54
    %v56 = vstv %s55
    %v57 = vadd.f32 %v42, %v56
    %v58 = vadd.f32 %v43, %v56
    %v59 = vadd.f32 %v44, %v56
    %v60 = vadd.f32 %v45, %v56
    %v61 = vadd.f32 %v46, %v56
    %v62 = vadd.f32 %v47, %v56
    %v63 = vadd.f32 %v48, %v56
    %v64 = vadd.f32 %v49, %v56
    %v65 = vadd.f32 %v50, %v56
    %v66 = vadd.f32 %v51, %v56
    %v67 = vadd.f32 %v52, %v56
    %v68 = vadd.f32 %v53, %v56
    %v69 = vrcp.pop 16.0
    %v70 = vmul.f32 %v57, %v69
    %v71 = vmul.f32 %v58, %v69
    %v72 = vmul.f32 %v59, %v69
    %v73 = vmul.f32 %v60, %v69
    %v74 = vmul.f32 %v61, %v69
    %v75 = vmul.f32 %v62, %v69
    %v76 = vmul.f32 %v63, %v69
    %v77 = vmul.f32 %v64, %v69
    %v78 = vmul.f32 %v65, %v69
    %v79 = vmul.f32 %v66, %v69
    %v80 = vmul.f32 %v67, %v69
    %v81 = vmul.f32 %v68, %v69
    %v82 = vfloor.f32 %v70
    %v83 = vfloor.f32 %v71
    %v84 = vfloor.f32 %v72
    %v85 = vfloor.f32 %v73
    %v86 = vfloor.f32 %v74
    %v87 = vfloor.f32 %v75
    %v88 = vfloor.f32 %v76
    %v89 = vfloor.f32 %v77
    %v90 = vfloor.f32 %v78
    %v91 = vfloor.f32 %v79
    %v92 = vfloor.f32 %v80
    %v93 = vfloor.f32 %v81
    %v94 = vmul.f32 %v82, 16.0
    %v95 = vmul.f32 %v83, 16.0
    %v96 = vmul.f32 %v84, 16.0
    %v97 = vmul.f32 %v85, 16.0
    %v98 = vmul.f32 %v86, 16.0
    %v99 = vmul.f32 %v87, 16.0
    %v100 = vmul.f32 %v88, 16.0
    %v101 = vmul.f32 %v89, 16.0
    %v102 = vmul.f32 %v90, 16.0
    %v103 = vmul.f32 %v91, 16.0
    %v104 = vmul.f32 %v92, 16.0
    %v105 = vmul.f32 %v93, 16.0
    %v106 = vsub.f32 %v57, %v94
    %v107 = vsub.f32 %v58, %v95
    %v108 = vsub.f32 %v59, %v96
    %v109 = vsub.f32 %v60, %v97
    %v110 = vsub.f32 %v61, %v98
    %v111 = vsub.f32 %v62, %v99
    %v112 = vsub.f32 %v63, %v100
    %v113 = vsub.f32 %v64, %v101
    %v114 = vsub.f32 %v65, %v102
    %v115 = vsub.f32 %v66, %v103
    %v116 = vsub.f32 %v67, %v104
    %v117 = vsub.f32 %v68, %v105
    %v118 = vmul.f32 %v82, %v69
    %v119 = vmul.f32 %v83, %v69
    %v120 = vmul.f32 %v84, %v69
    %v121 = vmul.f32 %v85, %v69
    %v122 = vmul.f32 %v86, %v69
    %v123 = vmul.f32 %v87, %v69
    %v124 = vmul.f32 %v88, %v69
    %v125 = vmul.f32 %v89, %v69
    %v126 = vmul.f32 %v90, %v69
    %v127 = vmul.f32 %v91, %v69
    %v128 = vmul.f32 %v92, %v69
    %v129 = vmul.f32 %v93, %v69
    %v130 = vfloor.f32 %v118
    %v131 = vfloor.f32 %v119
    %v132 = vfloor.f32 %v120
    %v133 = vfloor.f32 %v121
    %v134 = vfloor.f32 %v122
    %v135 = vfloor.f32 %v123
    %v136 = vfloor.f32 %v124
    %v137 = vfloor.f32 %v125
    %v138 = vfloor.f32 %v126
    %v139 = vfloor.f32 %v127
    %v140 = vfloor.f32 %v128
    %v141 = vfloor.f32 %v129
    %v142 = vmul.f32 %v130, 16.0
    %v143 = vmul.f32 %v131, 16.0
    %v144 = vmul.f32 %v132, 16.0
    %v145 = vmul.f32 %v133, 16.0
    %v146 = vmul.f32 %v134, 16.0
    %v147 = vmul.f32 %v135, 16.0
    %v148 = vmul.f32 %v136, 16.0
    %v149 = vmul.f32 %v137, 16.0
    %v150 = vmul.f32 %v138, 16.0
    %v151 = vmul.f32 %v139, 16.0
    %v152 = vmul.f32 %v140, 16.0
    %v153 = vmul.f32 %v141, 16.0
    %v154 = vsub.f32 %v82, %v142
    %v155 = vsub.f32 %v83, %v143
    %v156 = vsub.f32 %v84, %v144
    %v157 = vsub.f32 %v85, %v145
    %v158 = vsub.f32 %v86, %v146
    %v159 = vsub.f32 %v87, %v147
    %v160 = vsub.f32 %v88, %v148
    %v161 = vsub.f32 %v89, %v149
    %v162 = vsub.f32 %v90, %v150
    %v163 = vsub.f32 %v91, %v151
    %v164 = vsub.f32 %v92, %v152
    %v165 = vsub.f32 %v93, %v153
    %v166 = vrcp.pop 3.0
    %v167 = vmul.f32 %v130, %v166
    %v168 = vmul.f32 %v131, %v166
    %v169 = vmul.f32 %v132, %v166
    %v170 = vmul.f32 %v133, %v166
    %v171 = vmul.f32 %v134, %v166
    %v172 = vmul.f32 %v135, %v166
    %v173 = vmul.f32 %v136, %v166
    %v174 = vmul.f32 %v137, %v166
    %v175 = vmul.f32 %v138, %v166
    %v176 = vmul.f32 %v139, %v166
    %v177 = vmul.f32 %v140, %v166
    %v178 = vmul.f32 %v141, %v166
    %v179 = vfloor.f32 %v167
    %v180 = vfloor.f32 %v168
    %v181 = vfloor.f32 %v169
    %v182 = vfloor.f32 %v170
    %v183 = vfloor.f32 %v171
    %v184 = vfloor.f32 %v172
    %v185 = vfloor.f32 %v173
    %v186 = vfloor.f32 %v174
    %v187 = vfloor.f32 %v175
    %v188 = vfloor.f32 %v176
    %v189 = vfloor.f32 %v177
    %v190 = vfloor.f32 %v178
    %v191 = vmul.f32 %v179, 3.0
    %v192 = vmul.f32 %v180, 3.0
    %v193 = vmul.f32 %v181, 3.0
    %v194 = vmul.f32 %v182, 3.0
    %v195 = vmul.f32 %v183, 3.0
    %v196 = vmul.f32 %v184, 3.0
    %v197 = vmul.f32 %v185, 3.0
    %v198 = vmul.f32 %v186, 3.0
    %v199 = vmul.f32 %v187, 3.0
    %v200 = vmul.f32 %v188, 3.0
    %v201 = vmul.f32 %v189, 3.0
    %v202 = vmul.f32 %v190, 3.0
    %v203 = vsub.f32 %v130, %v191
    %v204 = vsub.f32 %v131, %v192
    %v205 = vsub.f32 %v132, %v193
    %v206 = vsub.f32 %v133, %v194
    %v207 = vsub.f32 %v134, %v195
    %v208 = vsub.f32 %v135, %v196
    %v209 = vsub.f32 %v136, %v197
    %v210 = vsub.f32 %v137, %v198
    %v211 = vsub.f32 %v138, %v199
    %v212 = vsub.f32 %v139, %v200
    %v213 = vsub.f32 %v140, %v201
    %v214 = vsub.f32 %v141, %v202
    %vm215 = vcmp.lt.f32.partialorder %v203, 1.5
    %vm216 = vcmp.lt.f32.partialorder %v204, 1.5
    %vm217 = vcmp.lt.f32.partialorder %v205, 1.5
    %vm218 = vcmp.lt.f32.partialorder %v206, 1.5
    %vm219 = vcmp.lt.f32.partialorder %v207, 1.5
    %vm220 = vcmp.lt.f32.partialorder %v208, 1.5
    %vm221 = vcmp.lt.f32.partialorder %v209, 1.5
    %vm222 = vcmp.lt.f32.partialorder %v210, 1.5
    %vm223 = vcmp.lt.f32.partialorder %v211, 1.5
    %vm224 = vcmp.lt.f32.partialorder %v212, 1.5
    %vm225 = vcmp.lt.f32.partialorder %v213, 1.5
    %vm226 = vcmp.lt.f32.partialorder %v214, 1.5
    %v227 = vsel %vm215, 2.375, 5.0
    %v228 = vsel %vm216, 2.375, 5.0
    %v229 = vsel %vm217, 2.375, 5.0
    %v230 = vsel %vm218, 2.375, 5.0
    %v231 = vsel %vm219, 2.375, 5.0
    %v232 = vsel %vm220, 2.375, 5.0
    %v233 = vsel %vm221, 2.375, 5.0
    %v234 = vsel %vm222, 2.375, 5.0
    %v235 = vsel %vm223, 2.375, 5.0
    %v236 = vsel %vm224, 2.375, 5.0
    %v237 = vsel %vm225, 2.375, 5.0
    %v238 = vsel %vm226, 2.375, 5.0
    %v239 = vsel %vm215, 4.5, 3.5
    %v240 = vsel %vm216, 4.5, 3.5
    %v241 = vsel %vm217, 4.5, 3.5
    %v242 = vsel %vm218, 4.5, 3.5
    %v243 = vsel %vm219, 4.5, 3.5
    %v244 = vsel %vm220, 4.5, 3.5
    %v245 = vsel %vm221, 4.5, 3.5
    %v246 = vsel %vm222, 4.5, 3.5
    %v247 = vsel %vm223, 4.5, 3.5
    %v248 = vsel %vm224, 4.5, 3.5
    %v249 = vsel %vm225, 4.5, 3.5
    %v250 = vsel %vm226, 4.5, 3.5
    %vm251 = vcmp.lt.f32.partialorder %v203, 0.5
    %vm252 = vcmp.lt.f32.partialorder %v204, 0.5
    %vm253 = vcmp.lt.f32.partialorder %v205, 0.5
    %vm254 = vcmp.lt.f32.partialorder %v206, 0.5
    %vm255 = vcmp.lt.f32.partialorder %v207, 0.5
    %vm256 = vcmp.lt.f32.partialorder %v208, 0.5
    %vm257 = vcmp.lt.f32.partialorder %v209, 0.5
    %vm258 = vcmp.lt.f32.partialorder %v210, 0.5
    %vm259 = vcmp.lt.f32.partialorder %v211, 0.5
    %vm260 = vcmp.lt.f32.partialorder %v212, 0.5
    %vm261 = vcmp.lt.f32.partialorder %v213, 0.5
    %vm262 = vcmp.lt.f32.partialorder %v214, 0.5
    %v263 = vsel %vm251, 1.5, %v227
    %v264 = vsel %vm252, 1.5, %v228
    %v265 = vsel %vm253, 1.5, %v229
    %v266 = vsel %vm254, 1.5, %v230
    %v267 = vsel %vm255, 1.5, %v231
    %v268 = vsel %vm256, 1.5, %v232
    %v269 = vsel %vm257, 1.5, %v233
    %v270 = vsel %vm258, 1.5, %v234
    %v271 = vsel %vm259, 1.5, %v235
    %v272 = vsel %vm260, 1.5, %v236
    %v273 = vsel %vm261, 1.5, %v237
    %v274 = vsel %vm262, 1.5, %v238
    %v275 = vsel %vm251, 2.0, %v239
    %v276 = vsel %vm252, 2.0, %v240
    %v277 = vsel %vm253, 2.0, %v241
    %v278 = vsel %vm254, 2.0, %v242
    %v279 = vsel %vm255, 2.0, %v243
    %v280 = vsel %vm256, 2.0, %v244
    %v281 = vsel %vm257, 2.0, %v245
    %v282 = vsel %vm258, 2.0, %v246
    %v283 = vsel %vm259, 2.0, %v247
    %v284 = vsel %vm260, 2.0, %v248
    %v285 = vsel %vm261, 2.0, %v249
    %v286 = vsel %vm262, 2.0, %v250
    %vm287 = vcmp.eq.s32.totalorder %v28, 0
    %vm288 = vcmp.eq.s32.totalorder %v28, 1
    %vm289 = vcmp.eq.s32.totalorder %v28, 2
    %v290 = vsel %vm289, %v263, %v275
    %v291 = vsel %vm289, %v264, %v276
    %v292 = vsel %vm289, %v265, %v277
    %v293 = vsel %vm289, %v266, %v278
    %v294 = vsel %vm289, %v267, %v279
    %v295 = vsel %vm289, %v268, %v280
    %v296 = vsel %vm289, %v269, %v281
    %v297 = vsel %vm289, %v270, %v282
    %v298 = vsel %vm289, %v271, %v283
    %v299 = vsel %vm289, %v272, %v284
    %v300 = vsel %vm289, %v273, %v285
    %v301 = vsel %vm289, %v274, %v286
    %v302 = vsel %vm288, %v154, %v290
    %v303 = vsel %vm288, %v155, %v291
    %v304 = vsel %vm288, %v156, %v292
    %v305 = vsel %vm288, %v157, %v293
    %v306 = vsel %vm288, %v158, %v294
    %v307 = vsel %vm288, %v159, %v295
    %v308 = vsel %vm288, %v160, %v296
    %v309 = vsel %vm288, %v161, %v297
    %v310 = vsel %vm288, %v162, %v298
    %v311 = vsel %vm288, %v163, %v299
    %v312 = vsel %vm288, %v164, %v300
    %v313 = vsel %vm288, %v165, %v301
    %v314 = vsel %vm287, %v106, %v302
    %v315 = vsel %vm287, %v107, %v303
    %v316 = vsel %vm287, %v108, %v304
    %v317 = vsel %vm287, %v109, %v305
    %v318 = vsel %vm287, %v110, %v306
    %v319 = vsel %vm287, %v111, %v307
    %v320 = vsel %vm287, %v112, %v308
    %v321 = vsel %vm287, %v113, %v309
    %v322 = vsel %vm287, %v114, %v310
    %v323 = vsel %vm287, %v115, %v311
    %v324 = vsel %vm287, %v116, %v312
    %v325 = vsel %vm287, %v117, %v313
    %vm326 = vcmp.lt.s32.totalorder %v28, 2
    %v327 = vxor.u32 %v21, 2147483648
    %v328 = vxor.u32 %v22, 2147483648
    %v329 = vxor.u32 %v23, 2147483648
    %v330 = vxor.u32 %v24, 2147483648
    %v331 = vxor.u32 %v25, 2147483648
    %v332 = vxor.u32 %v26, 2147483648
    %v333 = vmul.f32 %v327, 1.442695
    %v334 = vpow.pop %v333
    %v335 = vmul.f32 %v328, 1.442695
    %v336 = vpow.pop %v335
    %v337 = vmul.f32 %v329, 1.442695
    %v338 = vpow.pop %v337
    %v339 = vmul.f32 %v330, 1.442695
    %v340 = vpow.pop %v339
    %v341 = vmul.f32 %v331, 1.442695
    %v342 = vpow.pop %v341
    %v343 = vmul.f32 %v332, 1.442695
    %v344 = vpow.pop %v343
    %v345 = vadd.f32 %v334, 1.0
    %v346 = vadd.f32 %v336, 1.0
    %v347 = vadd.f32 %v338, 1.0
    %v348 = vadd.f32 %v340, 1.0
    %v349 = vadd.f32 %v342, 1.0
    %v350 = vadd.f32 %v344, 1.0
    %v351 = vrcp.pop %v345
    %v352 = vmul.f32 1.0, %v351
    %v353 = vrcp.pop %v346
    %v354 = vmul.f32 1.0, %v353
    %v355 = vrcp.pop %v347
    %v356 = vmul.f32 1.0, %v355
    %v357 = vrcp.pop %v348
    %v358 = vmul.f32 1.0, %v357
    %v359 = vrcp.pop %v349
    %v360 = vmul.f32 1.0, %v359
    %v361 = vrcp.pop %v350
    %v362 = vmul.f32 1.0, %v361
    %v375 = vcombine.low %v314, %v315
    %v376 = vcombine.low %v316, %v317
    %v377 = vcombine.low %v318, %v319
    %v378 = vcombine.low %v320, %v321
    %v379 = vcombine.low %v322, %v323
    %v380 = vcombine.low %v324, %v325
    %v387 = vadd.f32 %v352, %v375
    %v388 = vadd.f32 %v354, %v376
    %v389 = vadd.f32 %v356, %v377
    %v390 = vadd.f32 %v358, %v378
    %v391 = vadd.f32 %v360, %v379
    %v392 = vadd.f32 %v362, %v380
    %v393 = vmul.f32 %v21, 1.442695
    %v394 = vpow.pop %v393
    %v395 = vmul.f32 %v22, 1.442695
    %v396 = vpow.pop %v395
    %v397 = vmul.f32 %v23, 1.442695
    %v398 = vpow.pop %v397
    %v399 = vmul.f32 %v24, 1.442695
    %v400 = vpow.pop %v399
    %v401 = vmul.f32 %v25, 1.442695
    %v402 = vpow.pop %v401
    %v403 = vmul.f32 %v26, 1.442695
    %v404 = vpow.pop %v403
    %v405 = vmul.f32 %v394, %v375
    %v406 = vmul.f32 %v396, %v376
    %v407 = vmul.f32 %v398, %v377
    %v408 = vmul.f32 %v400, %v378
    %v409 = vmul.f32 %v402, %v379
    %v410 = vmul.f32 %v404, %v380
    %v417 = vcombine.high %v387, %v387
    %v418 = vcombine.high %v388, %v388
    %v419 = vcombine.high %v389, %v389
    %v420 = vcombine.high %v390, %v390
    %v421 = vcombine.high %v391, %v391
    %v422 = vcombine.high %v392, %v392
    %v435 = vcombine.high %v405, %v405
    %v436 = vcombine.high %v406, %v406
    %v437 = vcombine.high %v407, %v407
    %v438 = vcombine.high %v408, %v408
    %v439 = vcombine.high %v409, %v409
    %v440 = vcombine.high %v410, %v410
    %v447 = vsel %vm326, %v387, %v405
    %v448 = vsel %vm326, %v417, %v435
    %v449 = vsel %vm326, %v388, %v406
    %v450 = vsel %vm326, %v418, %v436
    %v451 = vsel %vm326, %v389, %v407
    %v452 = vsel %vm326, %v419, %v437
    %v453 = vsel %vm326, %v390, %v408
    %v454 = vsel %vm326, %v420, %v438
    %v455 = vsel %vm326, %v391, %v409
    %v456 = vsel %vm326, %v421, %v439
    %v457 = vsel %vm326, %v392, %v410
    %v458 = vsel %vm326, %v422, %v440
    %v471 = vcombine.low %v447, %v448
    %v472 = vcombine.low %v449, %v450
    %v473 = vcombine.low %v451, %v452
    %v474 = vcombine.low %v453, %v454
    %v475 = vcombine.low %v455, %v456
    %v476 = vcombine.low %v457, %v458
    %483 = vst [vmem:[#allocation5] sm:$0xff] %v471
    %484 = vst [vmem:[#allocation5 + $0x8] sm:$0xff] %v472
    %485 = vst [vmem:[#allocation5 + $0x10] sm:$0xff] %v473
    %486 = vst [vmem:[#allocation5 + $0x18] sm:$0xff] %v474
    %487 = vst [vmem:[#allocation5 + $0x20] sm:$0xff] %v475
    %488 = vst [vmem:[#allocation5 + $0x28] sm:$0xff] %v476
    // Predicated region
    $region10: #{tpu_custom_call.1} parent=1 // pred_check
      _
    $region11: #{tpu_custom_call.1} parent=1 // pred_check_branch
      %490 = sbr.rel (0) target = $region13
    $region12: #{tpu_custom_call.1} parent=1 // pred_region
      %s492 = ssub.s32 768, 768
      %493 = vsyncadd [#allocation4], %s492
      %s495 = sshll.u32 [#allocation5], 4
      %s496 = int_to_ptr.vmem [resolvable:$true] %s495
      %498 = dma.vmem_to_hbm [thread:$0]  %s496, 768, %s1, [#allocation4]
    $region13: #{tpu_custom_call.1} parent=1 // pred_fallthru
      _
    // Predicated region
    $region14: #{tpu_custom_call.1} parent=1 // pred_check
      _
    $region15: #{tpu_custom_call.1} parent=1 // pred_check_branch
      %500 = sbr.rel (0) target = $region17
    $region16: #{tpu_custom_call.1} parent=1 // pred_region
      %501 = dma.done [#allocation4], 768
    $region17: #{tpu_custom_call.1} parent=1 // pred_fallthru
      _
    %502 = vsyncpa [#allocation3], 1
    %503 = vsyncpa [#allocation4], 1

</llo_original>
